<compile_context>
chip_gen: v7x
topology: tpu7x:2x2x1
jax: 0.10.0
libtpu: 0.0.40
codegen_flags: <defaults>
</compile_context>

<pallas_src>
import functools

import jax
import jax.numpy as jnp
from jax import lax
from jax.experimental import pallas as pl
from jax.experimental.pallas import tpu as pltpu


def _mcc_kernel(logits_ref, out_ref, num_acc_ref, den_acc_ref, *,
                temperature, batch_size, mask_rows):
    pid = pl.program_id(0)

    @pl.when(pid == 0)
    def _():
        num_acc_ref[...] = jnp.zeros_like(num_acc_ref)
        den_acc_ref[...] = jnp.zeros_like(den_acc_ref)

    # Keep all math in f32: v5e's VPU/EUP have no bf16 path, and f32 is the
    # correct lowest common denominator across v5e/v6e/v7x.
    logits = logits_ref[...].astype(jnp.float32)                 # [Bt, C]
    bt, num_classes = logits.shape

    if mask_rows:
        # Last block may be padded with undefined rows; neutralize them so the
        # softmax/exp path stays finite, then zero their contribution via u.
        row = pid * bt + lax.broadcasted_iota(jnp.int32, (bt, 1), 0)
        valid = row < batch_size                                 # [Bt, 1]
        logits = jnp.where(valid, logits, 0.0)

    # --- temperature softmax over classes (lanes) ---
    z = logits * jnp.float32(1.0 / temperature)
    z = z - jnp.max(z, axis=1, keepdims=True)
    ez = jnp.exp(z)
    # reciprocal-multiply keeps the divide on the (otherwise idle) EUP slot
    p = ez * pl.reciprocal(jnp.sum(ez, axis=1, keepdims=True))   # [Bt, C]

    # --- entropy-based sample weights (unnormalized; global scale cancels) ---
    H = -jnp.sum(p * jnp.log(p + 1e-5), axis=1, keepdims=True)   # [Bt, 1]
    u = 1.0 + jnp.exp(-H)                                        # [Bt, 1]
    if mask_rows:
        u = jnp.where(valid, u, 0.0)
    up = u * p                                                   # [Bt, C]

    # --- accumulate CCM row-sums and diagonal without the C x C matrix ---
    den_acc_ref[...] += jnp.sum(up, axis=0, keepdims=True)       # Σ_b u·p[b,j]
    num_acc_ref[...] += jnp.sum(up * p, axis=0, keepdims=True)   # Σ_b u·p[b,j]^2

    @pl.when(pid == pl.num_programs(0) - 1)
    def _():
        # Σ(CCM_normalized) == C exactly, so only the normalized trace remains:
        #   loss = (C - Σ_j diag_j / rowsum_j) / C
        trace_n = jnp.sum(num_acc_ref[...] * pl.reciprocal(den_acc_ref[...]))
        out_ref[0, 0] = 1.0 - trace_n * jnp.float32(1.0 / num_classes)


def minimum_class_confusion_loss(logits, temperature: float = 3.0,
                                 block_rows: int = 512):
    """Pallas TPU implementation of MinimumClassConfusionLoss.forward."""
    B, C = logits.shape

    # Row tile: whole batch if small, else a multiple of 8 (layout rule) capped
    # at block_rows. At 512 rows x C f32 the double-buffered input easily fits
    # the 16/32 MiB scoped-VMEM defaults on v5e/v7x, so no vmem_limit override.
    if B <= block_rows:
        bt = B
    else:
        bt = max(8, (block_rows // 8) * 8)
    grid = pl.cdiv(B, bt)
    mask_rows = (B % bt) != 0

    kernel = functools.partial(_mcc_kernel, temperature=temperature,
                               batch_size=B, mask_rows=mask_rows)

    # Tiny, honest cost hint so XLA overlaps this call with surrounding work.
    cost = pl.CostEstimate(flops=12 * B * C,
                           transcendentals=4 * B * C,
                           bytes_accessed=B * C * 4 + 4)

    out = pl.pallas_call(
        kernel,
        out_shape=jax.ShapeDtypeStruct((1, 1), jnp.float32),
        grid_spec=pltpu.PrefetchScalarGridSpec(
            num_scalar_prefetch=0,
            grid=(grid,),
            in_specs=[pl.BlockSpec((bt, C), lambda i: (i, 0))],
            out_specs=pl.BlockSpec((1, 1), lambda i: (0, 0),
                                   memory_space=pltpu.MemorySpace.SMEM),
            scratch_shapes=[pltpu.VMEM((1, C), jnp.float32),   # Σ u·p²  (diag)
                            pltpu.VMEM((1, C), jnp.float32)],  # Σ u·p   (rowsum)
        ),
        compiler_params=pltpu.CompilerParams(
            dimension_semantics=("arbitrary",)),               # B is a reduction axis
        cost_estimate=cost,
    )(logits)
    return out[0, 0]


def _reference(logits, temperature=3.0):
    """Pure-JAX reference mirroring the PyTorch code path literally
    (keeps the w = B·w/Σw rescale so the test validates its cancellation)."""
    logits = logits.astype(jnp.float32)
    B, C = logits.shape
    p = jax.nn.softmax(logits / temperature, axis=1)
    H = -jnp.sum(p * jnp.log(p + 1e-5), axis=1)
    w = 1.0 + jnp.exp(-H)
    w = (B * w / jnp.sum(w))[:, None]
    ccm = (p * w).T @ p
    ccm = ccm / jnp.sum(ccm, axis=1)          # same broadcast as torch
    return (jnp.sum(ccm) - jnp.trace(ccm)) / C


if __name__ == "__main__":
    key = jax.random.PRNGKey(0)
    batch_size, num_classes = 8, 6            # small shapes consistent with [B, C] logits
    logits = jax.random.normal(key, (batch_size, num_classes), dtype=jnp.float32) * 2.0

    loss = minimum_class_confusion_loss(logits, temperature=3.0)
    loss = jax.block_until_ready(loss)

    ref = _reference(logits, temperature=3.0)
    assert jnp.allclose(loss, ref, rtol=1e-5, atol=1e-6), (loss, ref)

    print("KERNEL_OK")
</pallas_src>

<mosaic_0001>
module attributes {stable_mosaic.version = 11 : i64} {
  func.func @_mcc_kernel(%arg0: i32, %arg1: memref<8x6xf32, #tpu.memory_space<vmem>>, %arg2: memref<1x1xf32, #tpu.memory_space<smem>>, %arg3: memref<1x6xf32, #tpu.memory_space<vmem>>, %arg4: memref<1x6xf32, #tpu.memory_space<vmem>>) attributes {dimension_semantics = [#tpu.dimension_semantics<arbitrary>], iteration_bounds = array<i64: 1>, scalar_prefetch = 0 : i64, scratch_operands = 2 : i64, tpu.core_type = #tpu.core_type<tc>, window_params = [{transform_indices = @transform_0, window_bounds = array<i64: 8, 6>}, {transform_indices = @transform_1, window_bounds = array<i64: 1, 1>}]} {
    %c0_i32 = arith.constant 0 : i32
    %0 = arith.cmpi eq, %arg0, %c0_i32 : i32
    %1 = arith.extui %0 : i1 to i32
    %c0_i32_0 = arith.constant 0 : i32
    %2 = arith.cmpi ne, %1, %c0_i32_0 : i32
    scf.if %2 {
      %cst_21 = arith.constant 0.000000e+00 : f32
      %45 = vector.broadcast %cst_21 : f32 to vector<1x6xf32>
      %c0_22 = arith.constant 0 : index
      %c0_23 = arith.constant 0 : index
      %46 = vector.load %arg3[%c0_22, %c0_23] : memref<1x6xf32, #tpu.memory_space<vmem>>, vector<1x6xf32>
      tpu.vector_store %arg3[%c0_22, %c0_23], %45 {strides = array<i32>} : memref<1x6xf32, #tpu.memory_space<vmem>>, vector<1x6xf32>,
      %cst_24 = arith.constant 0.000000e+00 : f32
      %47 = vector.broadcast %cst_24 : f32 to vector<1x6xf32>
      %c0_25 = arith.constant 0 : index
      %c0_26 = arith.constant 0 : index
      %48 = vector.load %arg4[%c0_25, %c0_26] : memref<1x6xf32, #tpu.memory_space<vmem>>, vector<1x6xf32>
      tpu.vector_store %arg4[%c0_25, %c0_26], %47 {strides = array<i32>} : memref<1x6xf32, #tpu.memory_space<vmem>>, vector<1x6xf32>,
    } else {
    }
    %c0 = arith.constant 0 : index
    %c0_1 = arith.constant 0 : index
    %3 = vector.load %arg1[%c0, %c0_1] : memref<8x6xf32, #tpu.memory_space<vmem>>, vector<8x6xf32>
    %cst = arith.constant 0.333333343 : f32
    %4 = vector.broadcast %cst : f32 to vector<8x6xf32>
    %5 = arith.mulf %3, %4 : vector<8x6xf32>
    %cst_2 = arith.constant dense<0xFF800000> : vector<8xf32>
    %6 = vector.multi_reduction <maximumf>, %5, %cst_2 [1] : vector<8x6xf32> to vector<8xf32>
    %7 = vector.shape_cast %6 : vector<8xf32> to vector<8x1xf32>
    %8 = vector.broadcast %7 : vector<8x1xf32> to vector<8x6xf32>
    %9 = arith.subf %5, %8 : vector<8x6xf32>
    %10 = math.exp %9 : vector<8x6xf32>
    %cst_3 = arith.constant dense<0.000000e+00> : vector<8xf32>
    %11 = vector.multi_reduction <add>, %10, %cst_3 [1] : vector<8x6xf32> to vector<8xf32>
    %12 = vector.shape_cast %11 : vector<8xf32> to vector<8x1xf32>
    %13 = tpu.reciprocal %12 : vector<8x1xf32> -> vector<8x1xf32>
    %14 = vector.broadcast %13 : vector<8x1xf32> to vector<8x6xf32>
    %15 = arith.mulf %10, %14 : vector<8x6xf32>
    %cst_4 = arith.constant 9.99999974E-6 : f32
    %16 = vector.broadcast %cst_4 : f32 to vector<8x6xf32>
    %17 = arith.addf %15, %16 : vector<8x6xf32>
    %18 = math.log %17 : vector<8x6xf32>
    %19 = arith.mulf %15, %18 : vector<8x6xf32>
    %cst_5 = arith.constant dense<0.000000e+00> : vector<8xf32>
    %20 = vector.multi_reduction <add>, %19, %cst_5 [1] : vector<8x6xf32> to vector<8xf32>
    %21 = vector.shape_cast %20 : vector<8xf32> to vector<8x1xf32>
    %cst_6 = arith.constant 0.000000e+00 : f32
    %22 = vector.broadcast %cst_6 : f32 to vector<8x1xf32>
    %23 = arith.subf %22, %21 : vector<8x1xf32>
    %cst_7 = arith.constant 0.000000e+00 : f32
    %24 = vector.broadcast %cst_7 : f32 to vector<8x1xf32>
    %25 = arith.subf %24, %23 : vector<8x1xf32>
    %26 = math.exp %25 : vector<8x1xf32>
    %cst_8 = arith.constant 1.000000e+00 : f32
    %27 = vector.broadcast %cst_8 : f32 to vector<8x1xf32>
    %28 = arith.addf %27, %26 : vector<8x1xf32>
    %29 = vector.broadcast %28 : vector<8x1xf32> to vector<8x6xf32>
    %30 = arith.mulf %29, %15 : vector<8x6xf32>
    %c0_9 = arith.constant 0 : index
    %c0_10 = arith.constant 0 : index
    %31 = vector.load %arg4[%c0_9, %c0_10] : memref<1x6xf32, #tpu.memory_space<vmem>>, vector<1x6xf32>
    %cst_11 = arith.constant dense<0.000000e+00> : vector<6xf32>
    %32 = vector.multi_reduction <add>, %30, %cst_11 [0] : vector<8x6xf32> to vector<6xf32>
    %33 = vector.shape_cast %32 : vector<6xf32> to vector<1x6xf32>
    %34 = arith.addf %31, %33 : vector<1x6xf32>
    %c0_12 = arith.constant 0 : index
    %c0_13 = arith.constant 0 : index
    %35 = vector.load %arg4[%c0_12, %c0_13] : memref<1x6xf32, #tpu.memory_space<vmem>>, vector<1x6xf32>
    tpu.vector_store %arg4[%c0_12, %c0_13], %34 {strides = array<i32>} : memref<1x6xf32, #tpu.memory_space<vmem>>, vector<1x6xf32>,
    %c0_14 = arith.constant 0 : index
    %c0_15 = arith.constant 0 : index
    %36 = vector.load %arg3[%c0_14, %c0_15] : memref<1x6xf32, #tpu.memory_space<vmem>>, vector<1x6xf32>
    %37 = arith.mulf %30, %15 : vector<8x6xf32>
    %cst_16 = arith.constant dense<0.000000e+00> : vector<6xf32>
    %38 = vector.multi_reduction <add>, %37, %cst_16 [0] : vector<8x6xf32> to vector<6xf32>
    %39 = vector.shape_cast %38 : vector<6xf32> to vector<1x6xf32>
    %40 = arith.addf %36, %39 : vector<1x6xf32>
    %c0_17 = arith.constant 0 : index
    %c0_18 = arith.constant 0 : index
    %41 = vector.load %arg3[%c0_17, %c0_18] : memref<1x6xf32, #tpu.memory_space<vmem>>, vector<1x6xf32>
    tpu.vector_store %arg3[%c0_17, %c0_18], %40 {strides = array<i32>} : memref<1x6xf32, #tpu.memory_space<vmem>>, vector<1x6xf32>,
    %c0_i32_19 = arith.constant 0 : i32
    %42 = arith.cmpi eq, %arg0, %c0_i32_19 : i32
    %43 = arith.extui %42 : i1 to i32
    %c0_i32_20 = arith.constant 0 : i32
    %44 = arith.cmpi ne, %43, %c0_i32_20 : i32
    scf.if %44 {
      %c0_21 = arith.constant 0 : index
      %c0_22 = arith.constant 0 : index
      %45 = vector.load %arg3[%c0_21, %c0_22] : memref<1x6xf32, #tpu.memory_space<vmem>>, vector<1x6xf32>
      %c0_23 = arith.constant 0 : index
      %c0_24 = arith.constant 0 : index
      %46 = vector.load %arg4[%c0_23, %c0_24] : memref<1x6xf32, #tpu.memory_space<vmem>>, vector<1x6xf32>
      %47 = tpu.reciprocal %46 : vector<1x6xf32> -> vector<1x6xf32>
      %48 = arith.mulf %45, %47 : vector<1x6xf32>
      %49 = vector.shape_cast %48 : vector<1x6xf32> to vector<1x1x6xf32>
      %cst_25 = arith.constant dense<0.000000e+00> : vector<1xf32>
      %50 = vector.multi_reduction <add>, %49, %cst_25 [1, 2] : vector<1x1x6xf32> to vector<1xf32>
      %51 = vector.shape_cast %50 : vector<1xf32> to vector<1x1x1xf32>
      %52 = vector.extract %51[0, 0, 0] : f32 from vector<1x1x1xf32>
      %cst_26 = arith.constant 0.166666672 : f32
      %53 = arith.mulf %52, %cst_26 : f32
      %cst_27 = arith.constant 1.000000e+00 : f32
      %54 = arith.subf %cst_27, %53 : f32
      %c0_28 = arith.constant 0 : index
      %c0_29 = arith.constant 0 : index
      %55 = memref.load %arg2[%c0_28, %c0_29] : memref<1x1xf32, #tpu.memory_space<smem>>
      memref.store %54, %arg2[%c0_28, %c0_29] : memref<1x1xf32, #tpu.memory_space<smem>>
    } else {
    }
    return
  }
  func.func @transform_0(%arg0: i32) -> (i32, i32) {
    %c0_i32 = arith.constant 0 : i32
    %c0_i32_0 = arith.constant 0 : i32
    return %arg0, %c0_i32 : i32, i32
  }
  func.func @transform_1(%arg0: i32) -> (i32, i32) {
    %c0_i32 = arith.constant 0 : i32
    %c0_i32_0 = arith.constant 0 : i32
    %c0_i32_1 = arith.constant 0 : i32
    return %c0_i32, %c0_i32_0 : i32, i32
  }
}

</mosaic_0001>

<llo_original>
// kernel: tpu_custom_call.1
$region0: #{tpu_custom_call.1}
  #allocation0 [shape = 'u32[]', space=smem, size = 0x4, offset = 0x4, fixed_abs, tag = 'smem constant byte address 0x4 - core index']
  #allocation1 [shape = 'u32[144,128]{1,0:T(1,128)}', space=vmem, size = 0x12000, scoped, tag = 'internal scratch']
  #allocation2 [shape = 'f32[1,6]{1,0:T(1,128)}', space=vmem, size = 0x200, scoped, tag = 'scratch operand']
  #allocation3 [shape = 'f32[1,6]{1,0:T(1,128)}', space=vmem, size = 0x200, scoped, tag = 'scratch operand']
  %s0 = inlined_call_operand.hbm [shape: f32[8,6], index: 0, kind: input, shape index: {}]
  %s1 = inlined_call_operand.hbm [shape: f32[1,1], index: 1, kind: output, shape index: {}]
  %s2 = sld [smem:[#allocation0]]
  $region26: #{tpu_custom_call.1} parent=0
    _
  %s4 = ssub.s32 1, %s2
  %s5 = scalar_select 0, %s4, %s2
  $region1: #{tpu_custom_call.1} parent=0
    #allocation4 [shape = 'u8[4096]{0}', space=vmem, size = 0x1000, scoped, tag = 'input window, operand 0, single buffered']
    #allocation5 [shape = 's32[1]{0}', space=sflag, size = 0x4, scoped, tag = 'scoped memory for tpu_custom_call.1']
    #allocation6 [shape = 's32[1]{0}', space=sflag, size = 0x4, scoped, tag = 'scoped memory for tpu_custom_call.1']
    #allocation7 [shape = 'u8[512]{0}', space=smem, size = 0x200, scoped, tag = 'output window, operand 0, single buffered']
    %6 = vsyncpa [#allocation5], 0
    %7 = vsyncpa [#allocation6], 0
    // Predicated region
    $region2: #{tpu_custom_call.1} parent=1 // pred_check
      _
    $region3: #{tpu_custom_call.1} parent=1 // pred_check_branch
      %9 = sbr.rel (0) target = $region5
    $region4: #{tpu_custom_call.1} parent=1 // pred_region
      %s11 = ssub.s32 128, 128
      %12 = vsyncadd [#allocation5], %s11
      %s14 = sshll.u32 [#allocation4], 4
      %s15 = int_to_ptr.vmem [resolvable:$true] %s14
      %17 = dma.hbm_to_vmem [thread:$0]  %s0, 128, %s15, [#allocation5]
    $region5: #{tpu_custom_call.1} parent=1 // pred_fallthru
      _
    // Predicated region
    $region6: #{tpu_custom_call.1} parent=1 // pred_check
      _
    $region7: #{tpu_custom_call.1} parent=1 // pred_check_branch
      %19 = sbr.rel (0) target = $region9
    $region8: #{tpu_custom_call.1} parent=1 // pred_region
      %20 = dma.done [#allocation5], 128
    $region9: #{tpu_custom_call.1} parent=1 // pred_fallthru
      _
    %p21 = scmp.eq.s32.totalorder 0, 0
    // Predicated region
    $region10: #{tpu_custom_call.1} parent=1 // pred_check
      %p22 = pneg %p21
    $region11: #{tpu_custom_call.1} parent=1 // pred_check_branch
      %24 = sbr.rel (%p22) target = $region13
    $region12: #{tpu_custom_call.1} parent=1 // pred_region
      %vm25 = vcmask 40960
      %26 = vst.msk [vmem:[#allocation2] sm:$0x1] %vm25, 0.0
      %27 = vst.msk [vmem:[#allocation3] sm:$0x1] %vm25, 0.0
    $region13: #{tpu_custom_call.1} parent=1 // pred_fallthru
      _
    %v28 = vld [vmem:[#allocation4] sm:$0xff]
    %v29 = vmul.f32 %v28, 0.33333334
    %vm30 = vcmask 48128
    %v31 = vsel %vm30, %v29, -inf
    %32 = vmax.xlane.f32.xlu0 %v31
    %v33 = vpop.xlane.xlu0 %32
    %v34 = vsub.f32 %v29, %v33
    %v35 = vmul.f32 %v34, 1.442695
    %v36 = vpow.pop %v35
    %v37 = vsel %vm30, %v36, 0.0
    %38 = vadd.xlane.f32.xlu0 %v37
    %v39 = vpop.xlane.xlu0 %38
    %v40 = vrcp.pop %v39
    %v41 = vmul.f32 %v36, %v40
    %v42 = vadd.f32 %v41, 1e-05
    %v43 = vlog2.pop %v42
    %v44 = vmul.f32 %v43, 0.6931472
    %v45 = vmul.f32 %v41, %v44
    %v46 = vsel %vm30, %v45, 0.0
    %47 = vadd.xlane.f32.xlu0 %v46
    %v48 = vpop.xlane.xlu0 %47
    %v49 = vsub.f32 0.0, %v48
    %v50 = vsub.f32 0.0, %v49
    %v51 = vmul.f32 %v50, 1.442695
    %v52 = vpow.pop %v51
    %v53 = vadd.f32 %v52, 1.0
    %v54 = vmul.f32 %v53, %v41
    %v55 = vld [vmem:[#allocation3] sm:$0x1]
    %v56 = vsel %vm30, %v54, 0.0
    %v57 = vrot.slane %v56, 4
    %v58 = vadd.f32 %v56, %v57
    %v59 = vrot.slane %v58, 2
    %v60 = vadd.f32 %v58, %v59
    %v61 = vrot.slane %v60, 1
    %v62 = vadd.f32 %v60, %v61
    %v63 = vadd.f32 %v55, %v62
    %vm64 = vcmask 40960
    %65 = vst.msk [vmem:[#allocation3] sm:$0x1] %vm64, %v63
    %v66 = vld [vmem:[#allocation2] sm:$0x1]
    %v67 = vmul.f32 %v54, %v41
    %v68 = vsel %vm30, %v67, 0.0
    %v69 = vrot.slane %v68, 4
    %v70 = vadd.f32 %v68, %v69
    %v71 = vrot.slane %v70, 2
    %v72 = vadd.f32 %v70, %v71
    %v73 = vrot.slane %v72, 1
    %v74 = vadd.f32 %v72, %v73
    %v75 = vadd.f32 %v66, %v74
    %76 = vst.msk [vmem:[#allocation2] sm:$0x1] %vm64, %v75
    // Predicated region
    $region14: #{tpu_custom_call.1} parent=1 // pred_check
      %p77 = pneg %p21
    $region15: #{tpu_custom_call.1} parent=1 // pred_check_branch
      %79 = sbr.rel (%p77) target = $region17
    $region16: #{tpu_custom_call.1} parent=1 // pred_region
      %v80 = vld [vmem:[#allocation2] sm:$0x1]
      %v81 = vld [vmem:[#allocation3] sm:$0x1]
      %v82 = vrcp.pop %v81
      %v83 = vmul.f32 %v80, %v82
      %v84 = vsel %vm64, %v83, 0.0
      %85 = vadd.xlane.f32.xlu0 %v84
      %v86 = vpop.xlane.xlu0 %85
      %v87 = vrot.slane %v86, 4
      %v88 = vadd.f32 %v86, %v87
      %v89 = vrot.slane %v88, 2
      %v90 = vadd.f32 %v88, %v89
      %v91 = vrot.slane %v90, 1
      %v92 = vadd.f32 %v90, %v91
      %s93 = vtos %v92
      %s94 = smul.f32 %s93, 0.16666667
      %s95 = ssub.f32 1.0, %s94
      %s96 = scalar_lea.smem [#allocation7], 0
      %97 = sst [smem:[%s96]] %s95
    $region17: #{tpu_custom_call.1} parent=1 // pred_fallthru
      _
    // Predicated region
    $region18: #{tpu_custom_call.1} parent=1 // pred_check
      _
    $region19: #{tpu_custom_call.1} parent=1 // pred_check_branch
      %99 = sbr.rel (0) target = $region21
    $region20: #{tpu_custom_call.1} parent=1 // pred_region
      %s101 = ssub.s32 16, 16
      %102 = vsyncadd [#allocation6], %s101
      %105 = dma.smem_to_hbm [#allocation7], 16, %s1, [#allocation6]
    $region21: #{tpu_custom_call.1} parent=1 // pred_fallthru
      _
    // Predicated region
    $region22: #{tpu_custom_call.1} parent=1 // pred_check
      _
    $region23: #{tpu_custom_call.1} parent=1 // pred_check_branch
      %107 = sbr.rel (0) target = $region25
    $region24: #{tpu_custom_call.1} parent=1 // pred_region
      %108 = dma.done [#allocation6], 16
    $region25: #{tpu_custom_call.1} parent=1 // pred_fallthru
      _
    %109 = sfence
    %110 = vsyncpa [#allocation5], 1
    %111 = vsyncpa [#allocation6], 1

</llo_original>
